<compile_context>
chip_gen: v5e
topology: v5e:2x2
jax: 0.10.0
libtpu: 0.0.40
codegen_flags: <defaults>
</compile_context>

<pallas_src>
import functools

import jax
import jax.numpy as jnp
from jax import lax
from jax.experimental import pallas as pl
from jax.experimental.pallas import tpu as pltpu

EPS = 1e-6
NUM_GROUPS = 32
MIB = 1024 * 1024


# ----------------------------------------------------------------------------
# Generation-aware configuration (tile targets + VMEM limits)
# ----------------------------------------------------------------------------
def _vmem_capacity_bytes():
    try:
        info = pltpu.get_tpu_info()
        cap = getattr(info, "vmem_capacity_bytes", None)
        if cap:
            return int(cap)
    except Exception:
        pass
    return 128 * MIB


def _generation_config():
    """Tile targets / VMEM limits keyed off physical VMEM (v7x: 64 MiB/TC)."""
    cap = _vmem_capacity_bytes()
    if cap <= 72 * MIB:                       # v7x-class TensorCore
        return dict(t1=512, tq=1024, tk=512,
                    k1_vmem=44 * MIB, k2_vmem=44 * MIB)
    return dict(t1=1024, tq=2048, tk=1024,    # v5e / v6e: 128 MiB VMEM
                k1_vmem=64 * MIB, k2_vmem=100 * MIB)


# ----------------------------------------------------------------------------
# Single-buffering of constant operands (pl.Buffered(1)) with a safety probe
# ----------------------------------------------------------------------------
@functools.lru_cache(maxsize=None)
def _buffered_constants_supported():
    """Probe once whether pipeline_mode=pl.Buffered(1) lowers on this backend."""
    try:
        def probe(c_ref, x_ref, o_ref):
            o_ref[...] = x_ref[...] + c_ref[...]

        f = pl.pallas_call(
            probe,
            out_shape=jax.ShapeDtypeStruct((16, 128), jnp.float32),
            grid_spec=pltpu.PrefetchScalarGridSpec(
                num_scalar_prefetch=0,
                grid=(2,),
                in_specs=[
                    pl.BlockSpec((8, 128), lambda i: (0, 0),
                                 pipeline_mode=pl.Buffered(1)),
                    pl.BlockSpec((8, 128), lambda i: (i, 0)),
                ],
                out_specs=pl.BlockSpec((8, 128), lambda i: (i, 0)),
            ),
        )
        jax.block_until_ready(f(jnp.zeros((8, 128), jnp.float32),
                                jnp.zeros((16, 128), jnp.float32)))
        return True
    except Exception:
        return False


def _const_spec(block_shape):
    """BlockSpec for an operand whose block never changes across the grid."""
    kwargs = {}
    if _buffered_constants_supported():
        kwargs["pipeline_mode"] = pl.Buffered(1)   # single-buffer the constant
    return pl.BlockSpec(block_shape, lambda *_: (0,) * len(block_shape), **kwargs)


# ----------------------------------------------------------------------------
# Kernel 1a: per-group GroupNorm statistics (one batch element per step)
# ----------------------------------------------------------------------------
def _gn_stats_kernel(xg_ref, mean_ref, rstd_ref):
    """xg: (1, G, (C/G)*HW) f32 ; mean/rstd out: (1, G, 1) f32.

    Two-pass centered variance (no E[x^2]-E[x]^2 cancellation)."""
    xg = xg_ref[0]                                           # (G, N) f32
    inv_n = 1.0 / float(xg.shape[1])
    mean = jnp.sum(xg, axis=1, keepdims=True) * inv_n        # (G, 1)
    d = xg - mean
    var = jnp.sum(d * d, axis=1, keepdims=True) * inv_n      # (G, 1)
    mean_ref[0] = mean
    rstd_ref[0] = lax.rsqrt(var + EPS)


# ----------------------------------------------------------------------------
# Kernel 1b: normalize (precomputed per-channel scale/shift) + fused q/k/v
# ----------------------------------------------------------------------------
def _norm_qkv_kernel(x_ref, scale_ref, shift_ref, wqkv_ref, bqkv_ref, qkv_ref):
    """x: (1, C, T1) f32; scale/shift: (1, C, 1) f32; wqkv: (3C, C) bf16;
    bqkv: (3C, 1) f32; out qkv: (1, 3C, T1) bf16.  bf16 MXU, f32 accumulate."""
    h = (x_ref[0] * scale_ref[0] + shift_ref[0]).astype(jnp.bfloat16)   # (C, T1)
    qkv = jnp.dot(wqkv_ref[...], h,
                  preferred_element_type=jnp.float32) + bqkv_ref[...]   # (3C, T1)
    qkv_ref[0] = qkv.astype(jnp.bfloat16)


# ----------------------------------------------------------------------------
# Kernel 2: flash attention (online softmax) + proj_out + residual
# ----------------------------------------------------------------------------
def _flash_attn_kernel(x_ref, q_ref, k_ref, v_ref, wp_ref, bp_ref, o_ref,
                       m_sc, l_sc):
    """x: (1, C, TQ) f32 (residual); q: (1, C, TQ) bf16 (1/sqrt(C) pre-folded);
    k/v: (1, C, TK) bf16; wp: (C, C) bf16; bp: (C, 1) f32; o: (1, C, TQ) f32.

    o_ref doubles as the f32 accumulator: its block index ignores the KV grid
    axis, so the block stays resident in VMEM across the whole KV loop."""
    ki = pl.program_id(2)

    @pl.when(ki == 0)
    def _():
        m_sc[...] = jnp.full_like(m_sc, -jnp.inf)
        l_sc[...] = jnp.zeros_like(l_sc)
        o_ref[...] = jnp.zeros(o_ref.shape, o_ref.dtype)

    q = q_ref[0]                                  # (C, TQ) bf16
    k = k_ref[0]                                  # (C, TK) bf16
    v = v_ref[0]                                  # (C, TK) bf16

    # s[j, i] = sum_c k[c, j] * q[c, i]  -- contract channel dim, no k.T copy
    s = lax.dot_general(k, q, (((0,), (0,)), ((), ())),
                        preferred_element_type=jnp.float32)            # (TK, TQ)

    m_prev = m_sc[...]                                                  # (1, TQ)
    m_new = jnp.maximum(m_prev, jnp.max(s, axis=0, keepdims=True))
    alpha = jnp.exp(m_prev - m_new)                                     # (1, TQ)
    p = jnp.exp(s - m_new)                                              # (TK, TQ)

    l_sc[...] = alpha * l_sc[...] + jnp.sum(p, axis=0, keepdims=True)
    o_ref[0] = alpha * o_ref[0] + jnp.dot(v, p.astype(jnp.bfloat16),
                                          preferred_element_type=jnp.float32)
    m_sc[...] = m_new

    @pl.when(ki == pl.num_programs(2) - 1)
    def _():
        attn = o_ref[0] * pl.reciprocal(l_sc[...], approx=True)         # (C, TQ)
        h = jnp.dot(wp_ref[...], attn.astype(jnp.bfloat16),
                    preferred_element_type=jnp.float32) + bp_ref[...]
        o_ref[0] = x_ref[0] + h


# ----------------------------------------------------------------------------
# Wrapper
# ----------------------------------------------------------------------------
def _pick_tile(hw, target):
    """Largest multiple of 128 <= target dividing hw (hw itself if hw % 128)."""
    if hw % 128 != 0:
        return hw                 # legal (full-extent block) but a perf cliff
    t = max(128, (min(target, hw) // 128) * 128)
    while hw % t:
        t -= 128
    return t


def attn_block_pallas(x_nchw, params):
    """x_nchw: (B, C, H, W) float32 (PyTorch NCHW convention)."""
    B, C, H, W = x_nchw.shape
    assert C % NUM_GROUPS == 0, "GroupNorm(32) requires C % 32 == 0"
    HW = H * W
    G = NUM_GROUPS
    CG = C // G
    cfg = _generation_config()

    # NCHW -> (B, C, HW) and (B, G, CG*HW): free row-major reshapes, no
    # transposes through HBM.  HW stays the lane axis (lane-dense stores).
    x = x_nchw.reshape(B, C, HW).astype(jnp.float32)
    xg = x.reshape(B, G, CG * HW)

    gamma = params["gamma"].astype(jnp.float32)              # (C,)
    beta = params["beta"].astype(jnp.float32)

    # conv2d 1x1 weights (out, in, 1, 1): channels-first y = W @ h + b.
    # Fold the 1/sqrt(C) attention scale into wq / bq at trace time.
    scale_q = float(C) ** (-0.5)
    wq = params["wq"][:, :, 0, 0] * scale_q
    wk = params["wk"][:, :, 0, 0]
    wv = params["wv"][:, :, 0, 0]
    wqkv = jnp.concatenate([wq, wk, wv], axis=0).astype(jnp.bfloat16)   # (3C, C)
    bqkv = jnp.concatenate(
        [params["bq"] * scale_q, params["bk"], params["bv"]]
    ).reshape(3 * C, 1).astype(jnp.float32)
    wp = params["wp"][:, :, 0, 0].astype(jnp.bfloat16)                  # (C, C)
    bp = params["bp"].reshape(C, 1).astype(jnp.float32)

    # ---------------- Kernel 1a: per-group GroupNorm statistics ------------
    mean_g, rstd_g = pl.pallas_call(
        _gn_stats_kernel,
        out_shape=(jax.ShapeDtypeStruct((B, G, 1), jnp.float32),
                   jax.ShapeDtypeStruct((B, G, 1), jnp.float32)),
        grid_spec=pltpu.PrefetchScalarGridSpec(
            num_scalar_prefetch=0,
            grid=(B,),
            in_specs=[pl.BlockSpec((1, G, CG * HW), lambda b: (b, 0, 0))],
            out_specs=[pl.BlockSpec((1, G, 1), lambda b: (b, 0, 0)),
                       pl.BlockSpec((1, G, 1), lambda b: (b, 0, 0))],
        ),
        compiler_params=pltpu.CompilerParams(
            dimension_semantics=("parallel",),
            vmem_limit_bytes=cfg["k1_vmem"]),
        cost_estimate=pl.CostEstimate(
            flops=4 * B * C * HW, transcendentals=0,
            bytes_accessed=B * C * HW * 4),
    )(xg)

    # Tiny per-channel affine fold on (B, C) arrays in plain JAX:
    # h = x * scale + shift  with  scale = rstd*gamma, shift = beta - mean*scale
    mean_c = jnp.repeat(mean_g[:, :, 0], CG, axis=1)          # (B, C)
    rstd_c = jnp.repeat(rstd_g[:, :, 0], CG, axis=1)          # (B, C)
    gscale = rstd_c * gamma[None, :]
    scale = gscale[:, :, None]                                # (B, C, 1)
    shift = (beta[None, :] - mean_c * gscale)[:, :, None]     # (B, C, 1)

    # ---------------- Kernel 1b: normalize + fused q/k/v (tiled over HW) ---
    T1 = _pick_tile(HW, cfg["t1"])
    n1 = HW // T1
    qkv = pl.pallas_call(
        _norm_qkv_kernel,
        out_shape=jax.ShapeDtypeStruct((B, 3 * C, HW), jnp.bfloat16),
        grid_spec=pltpu.PrefetchScalarGridSpec(
            num_scalar_prefetch=0,
            grid=(B, n1),
            in_specs=[
                pl.BlockSpec((1, C, T1), lambda b, t: (b, 0, t)),   # x
                pl.BlockSpec((1, C, 1), lambda b, t: (b, 0, 0)),    # scale
                pl.BlockSpec((1, C, 1), lambda b, t: (b, 0, 0)),    # shift
                _const_spec((3 * C, C)),                            # wqkv
                _const_spec((3 * C, 1)),                            # bqkv
            ],
            out_specs=pl.BlockSpec((1, 3 * C, T1), lambda b, t: (b, 0, t)),
        ),
        compiler_params=pltpu.CompilerParams(
            dimension_semantics=("parallel", "parallel"),
            vmem_limit_bytes=cfg["k1_vmem"]),
        cost_estimate=pl.CostEstimate(
            flops=2 * B * HW * 3 * C * C,
            transcendentals=0,
            bytes_accessed=(B * C * HW * 4 + B * 3 * C * HW * 2
                            + 3 * C * C * 2)),
    )(x, scale, shift, wqkv, bqkv)

    # ---------------- Kernel 2: flash attention + proj + residual ----------
    TQ = _pick_tile(HW, cfg["tq"])
    TK = _pick_tile(HW, cfg["tk"])
    nq, nk = HW // TQ, HW // TK

    out = pl.pallas_call(
        _flash_attn_kernel,
        out_shape=jax.ShapeDtypeStruct((B, C, HW), jnp.float32),
        grid_spec=pltpu.PrefetchScalarGridSpec(
            num_scalar_prefetch=0,
            grid=(B, nq, nk),
            in_specs=[
                pl.BlockSpec((1, C, TQ), lambda b, qi, ki: (b, 0, qi)),  # x
                pl.BlockSpec((1, C, TQ), lambda b, qi, ki: (b, 0, qi)),  # q
                pl.BlockSpec((1, C, TK), lambda b, qi, ki: (b, 1, ki)),  # k
                pl.BlockSpec((1, C, TK), lambda b, qi, ki: (b, 2, ki)),  # v
                _const_spec((C, C)),                                     # wp
                _const_spec((C, 1)),                                     # bp
            ],
            out_specs=pl.BlockSpec((1, C, TQ), lambda b, qi, ki: (b, 0, qi)),
            scratch_shapes=[
                pltpu.VMEM((1, TQ), jnp.float32),   # running max
                pltpu.VMEM((1, TQ), jnp.float32),   # running sum
            ],
        ),
        compiler_params=pltpu.CompilerParams(
            dimension_semantics=("parallel", "parallel", "arbitrary"),
            vmem_limit_bytes=cfg["k2_vmem"]),
        cost_estimate=pl.CostEstimate(
            flops=2 * B * (2 * HW * HW * C + HW * C * C),
            transcendentals=B * HW * HW,
            bytes_accessed=(B * C * HW * 4                  # residual x
                            + B * C * HW * 2                # q
                            + 2 * B * C * HW * 2 * nq       # k, v per q tile
                            + B * C * HW * 4                # out
                            + C * C * 2)),
    )(x, qkv, qkv, qkv, wp, bp)

    return out.reshape(B, C, H, W)


# ----------------------------------------------------------------------------
# Pure-JAX reference (mirrors the PyTorch forward) and parameter init
# ----------------------------------------------------------------------------
def attn_block_ref(x_nchw, params):
    B, C, H, W = x_nchw.shape
    cg = C // NUM_GROUPS
    xg = x_nchw.reshape(B, NUM_GROUPS, cg * H * W)
    mean = xg.mean(axis=-1, keepdims=True)
    var = xg.var(axis=-1, keepdims=True)
    h_ = ((xg - mean) / jnp.sqrt(var + EPS)).reshape(B, C, H, W)
    h_ = h_ * params["gamma"].reshape(1, C, 1, 1) + params["beta"].reshape(1, C, 1, 1)

    def conv1x1(t, w, b):
        return jnp.einsum("oc,bchw->bohw", w[:, :, 0, 0], t) + b.reshape(1, C, 1, 1)

    q = conv1x1(h_, params["wq"], params["bq"]).reshape(B, C, H * W)
    k = conv1x1(h_, params["wk"], params["bk"]).reshape(B, C, H * W)
    v = conv1x1(h_, params["wv"], params["bv"]).reshape(B, C, H * W)
    w_ = jnp.einsum("bci,bcj->bij", q, k) * (float(C) ** -0.5)
    w_ = jax.nn.softmax(w_, axis=2)
    out = jnp.einsum("bcj,bij->bci", v, w_).reshape(B, C, H, W)
    out = conv1x1(out, params["wp"], params["bp"])
    return x_nchw + out


def init_params(key, C):
    ks = jax.random.split(key, 10)
    scale = 1.0 / (C ** 0.5)
    return {
        "gamma": jax.random.normal(ks[0], (C,), jnp.float32) * 0.1 + 1.0,
        "beta": jax.random.normal(ks[1], (C,), jnp.float32) * 0.1,
        "wq": jax.random.normal(ks[2], (C, C, 1, 1), jnp.float32) * scale,
        "bq": jax.random.normal(ks[3], (C,), jnp.float32) * 0.01,
        "wk": jax.random.normal(ks[4], (C, C, 1, 1), jnp.float32) * scale,
        "bk": jax.random.normal(ks[5], (C,), jnp.float32) * 0.01,
        "wv": jax.random.normal(ks[6], (C, C, 1, 1), jnp.float32) * scale,
        "bv": jax.random.normal(ks[7], (C,), jnp.float32) * 0.01,
        "wp": jax.random.normal(ks[8], (C, C, 1, 1), jnp.float32) * scale,
        "bp": jax.random.normal(ks[9], (C,), jnp.float32) * 0.01,
    }


if __name__ == "__main__":
    key = jax.random.PRNGKey(0)
    k_x, k_p = jax.random.split(key)

    B, C, H, W = 2, 64, 16, 16          # C must be divisible by 32 (GroupNorm)
    x = jax.random.normal(k_x, (B, C, H, W), jnp.float32)
    params = init_params(k_p, C)

    out = jax.block_until_ready(attn_block_pallas(x, params))
    ref = jax.block_until_ready(attn_block_ref(x, params))

    assert out.shape == (B, C, H, W)
    max_err = float(jnp.max(jnp.abs(out - ref)))
    mean_err = float(jnp.mean(jnp.abs(out - ref)))
    # bf16 matmuls with f32 accumulation: loose-but-meaningful tolerance.
    assert max_err < 5e-2 and mean_err < 5e-3, (
        f"mismatch vs reference: max={max_err} mean={mean_err}")

    print("KERNEL_OK")
</pallas_src>

<mosaic_0001>
module attributes {stable_mosaic.version = 11 : i64} {
  func.func @_gn_stats_kernel(%arg0: i32, %arg1: memref<1x32x512xf32, #tpu.memory_space<vmem>>, %arg2: memref<1x32x1xf32, #tpu.memory_space<vmem>>, %arg3: memref<1x32x1xf32, #tpu.memory_space<vmem>>) attributes {dimension_semantics = [#tpu.dimension_semantics<parallel>], iteration_bounds = array<i64: 2>, scalar_prefetch = 0 : i64, scratch_operands = 0 : i64, tpu.core_type = #tpu.core_type<tc>, window_params = [{transform_indices = @transform_0, window_bounds = array<i64: 1, 32, 512>}, {transform_indices = @transform_1, window_bounds = array<i64: 1, 32, 1>}, {transform_indices = @transform_2, window_bounds = array<i64: 1, 32, 1>}]} {
    %c0 = arith.constant 0 : index
    %c0_0 = arith.constant 0 : index
    %c0_1 = arith.constant 0 : index
    %0 = vector.load %arg1[%c0, %c0_0, %c0_1] : memref<1x32x512xf32, #tpu.memory_space<vmem>>, vector<1x32x512xf32>
    %1 = vector.shape_cast %0 : vector<1x32x512xf32> to vector<32x512xf32>
    %cst = arith.constant dense<0.000000e+00> : vector<32xf32>
    %2 = vector.multi_reduction <add>, %1, %cst [1] : vector<32x512xf32> to vector<32xf32>
    %3 = vector.shape_cast %2 : vector<32xf32> to vector<32x1xf32>
    %cst_2 = arith.constant 0.001953125 : f32
    %4 = vector.broadcast %cst_2 : f32 to vector<32x1xf32>
    %5 = arith.mulf %3, %4 : vector<32x1xf32>
    %6 = vector.broadcast %5 : vector<32x1xf32> to vector<32x512xf32>
    %7 = arith.subf %1, %6 : vector<32x512xf32>
    %8 = arith.mulf %7, %7 : vector<32x512xf32>
    %cst_3 = arith.constant dense<0.000000e+00> : vector<32xf32>
    %9 = vector.multi_reduction <add>, %8, %cst_3 [1] : vector<32x512xf32> to vector<32xf32>
    %10 = vector.shape_cast %9 : vector<32xf32> to vector<32x1xf32>
    %cst_4 = arith.constant 0.001953125 : f32
    %11 = vector.broadcast %cst_4 : f32 to vector<32x1xf32>
    %12 = arith.mulf %10, %11 : vector<32x1xf32>
    %c0_5 = arith.constant 0 : index
    %c0_6 = arith.constant 0 : index
    %c0_7 = arith.constant 0 : index
    %13 = vector.load %arg2[%c0_5, %c0_6, %c0_7] : memref<1x32x1xf32, #tpu.memory_space<vmem>>, vector<1x32x1xf32>
    %14 = vector.shape_cast %13 : vector<1x32x1xf32> to vector<32x1xf32>
    %15 = vector.shape_cast %5 : vector<32x1xf32> to vector<1x32x1xf32>
    tpu.vector_store %arg2[%c0_5, %c0_6, %c0_7], %15 {strides = array<i32>} : memref<1x32x1xf32, #tpu.memory_space<vmem>>, vector<1x32x1xf32>,
    %cst_8 = arith.constant 9.99999997E-7 : f32
    %16 = vector.broadcast %cst_8 : f32 to vector<32x1xf32>
    %17 = arith.addf %12, %16 : vector<32x1xf32>
    %18 = math.rsqrt %17 : vector<32x1xf32>
    %c0_9 = arith.constant 0 : index
    %c0_10 = arith.constant 0 : index
    %c0_11 = arith.constant 0 : index
    %19 = vector.load %arg3[%c0_9, %c0_10, %c0_11] : memref<1x32x1xf32, #tpu.memory_space<vmem>>, vector<1x32x1xf32>
    %20 = vector.shape_cast %19 : vector<1x32x1xf32> to vector<32x1xf32>
    %21 = vector.shape_cast %18 : vector<32x1xf32> to vector<1x32x1xf32>
    tpu.vector_store %arg3[%c0_9, %c0_10, %c0_11], %21 {strides = array<i32>} : memref<1x32x1xf32, #tpu.memory_space<vmem>>, vector<1x32x1xf32>,
    return
  }
  func.func @transform_0(%arg0: i32) -> (i32, i32, i32) {
    %c0_i32 = arith.constant 0 : i32
    %c0_i32_0 = arith.constant 0 : i32
    %c0_i32_1 = arith.constant 0 : i32
    return %arg0, %c0_i32, %c0_i32_0 : i32, i32, i32
  }
  func.func @transform_1(%arg0: i32) -> (i32, i32, i32) {
    %c0_i32 = arith.constant 0 : i32
    %c0_i32_0 = arith.constant 0 : i32
    %c0_i32_1 = arith.constant 0 : i32
    return %arg0, %c0_i32, %c0_i32_0 : i32, i32, i32
  }
  func.func @transform_2(%arg0: i32) -> (i32, i32, i32) {
    %c0_i32 = arith.constant 0 : i32
    %c0_i32_0 = arith.constant 0 : i32
    %c0_i32_1 = arith.constant 0 : i32
    return %arg0, %c0_i32, %c0_i32_0 : i32, i32, i32
  }
}

</mosaic_0001>

<llo_original>
// kernel: tpu_custom_call.1
$region0: #{tpu_custom_call.1}
  #allocation0 [shape = 'u32[]', space=smem, size = 0x4, offset = 0x4, fixed_abs, tag = 'smem constant byte address 0x4 - core index']
  #allocation1 [shape = 'u32[72,128]{1,0:T(1,128)}', space=vmem, size = 0x9000, scoped, tag = 'internal scratch']
  %s0 = inlined_call_operand.hbm [shape: f32[2,32,512], index: 0, kind: input, shape index: {}]
  %s1 = inlined_call_operand.vmem [shape: f32[2,32,1], index: 1, kind: output, shape index: {0}]
  %s2 = inlined_call_operand.vmem [shape: f32[2,32,1], index: 2, kind: output, shape index: {1}]
  %3 = xla_tuple %s1, %s2
  %s4 = sld [smem:[#allocation0]]
  $region49: #{tpu_custom_call.1} parent=0
    _
  %s6 = ssub.s32 1, %s4
  %s7 = scalar_select 0, %s6, %s4
  $region1: #{tpu_custom_call.1} parent=0
    #allocation2 [shape = 'u8[131072]{0}', space=vmem, size = 0x20000, scoped, tag = 'input window, operand 0']
    #allocation3 [shape = 's32[2]{0}', space=sflag, size = 0x8, scoped, tag = 'scoped memory for tpu_custom_call.1']
    %8 = vsyncpa [#allocation3], 0
    %s9 = scalar_lea.sflag [#allocation3], 1
    %10 = vsyncpa %s9, 0
    loop: start=0, step=1, limit=4
    $region2: #{tpu_custom_call.1} parent=1 // loop_pre_header
      _
    $region3: #{tpu_custom_call.1} parent=1 // loop_header
      %s12 = sphi 0, %s16
      %p13 = scmp.ge.s32.totalorder %s12, 4
      %s22 = sphi 0, %s24
      %s25 = sphi 0, %s22
      %s26 = sphi 0, %s25
      %s42 = sphi 0, %s26
      %s48 = sphi 0, %s50
      %s51 = sphi 0, %s48
      %s52 = sphi 0, %s51
      %s68 = sphi 0, %s52
      %s74 = sphi 0, %s76
      %s77 = sphi 0, %s74
      %s78 = sphi 0, %s77
      %s94 = sphi 0, %s78
    $region4: #{tpu_custom_call.1} parent=1 // loop_header_branch
      %15 = sbr.rel (%p13) target = $region8
    $region5: #{tpu_custom_call.1} parent=1 // loop_body
      %s17 = ssub.s32 %s12, 1
      %s18 = ssub.s32 %s12, 2
      %s19 = sadd.s32 %s12, 1
      %s20 = ssub.s32 %s12, %s19
      %p21 = scmp.eq.s32.totalorder %s20, 0
      %s23 = sadd.s32 %s22, 1
      %s24 = scalar_select %p21, %s22, %s23
      %p27 = pneg %p21
      %p28 = scmp.eq.s32.totalorder %s12, 1
      %p29 = por %p27, %p28
      %p30 = scmp.ne.s32.totalorder %s22, %s25
      %p31 = scmp.eq.s32.totalorder %s12, 0
      %p32 = por %p30, %p31
      %p33 = scmp.ne.s32.totalorder %s22, %s25
      %p34 = scmp.eq.s32.totalorder %s17, 1
      %p35 = por %p33, %p34
      %p36 = scmp.ne.s32.totalorder %s25, %s26
      %p37 = scmp.eq.s32.totalorder %s17, 0
      %p38 = por %p36, %p37
      %p39 = scmp.ne.s32.totalorder %s25, %s26
      %p40 = scmp.eq.s32.totalorder %s18, 1
      %p41 = por %p39, %p40
      %p43 = scmp.ne.s32.totalorder %s26, %s42
      %p44 = scmp.eq.s32.totalorder %s18, 0
      %p45 = por %p43, %p44
      %s46 = ssub.s32 %s12, %s19
      %p47 = scmp.eq.s32.totalorder %s46, 0
      %s49 = sadd.s32 %s48, 1
      %s50 = scalar_select %p47, %s48, %s49
      %p53 = pneg %p47
      %p54 = scmp.eq.s32.totalorder %s12, 1
      %p55 = por %p53, %p54
      %p56 = scmp.ne.s32.totalorder %s48, %s51
      %p57 = scmp.eq.s32.totalorder %s12, 0
      %p58 = por %p56, %p57
      %p59 = scmp.ne.s32.totalorder %s48, %s51
      %p60 = scmp.eq.s32.totalorder %s17, 1
      %p61 = por %p59, %p60
      %p62 = scmp.ne.s32.totalorder %s51, %s52
      %p63 = scmp.eq.s32.totalorder %s17, 0
      %p64 = por %p62, %p63
      %p65 = scmp.ne.s32.totalorder %s51, %s52
      %p66 = scmp.eq.s32.totalorder %s18, 1
      %p67 = por %p65, %p66
      %p69 = scmp.ne.s32.totalorder %s52, %s68
      %p70 = scmp.eq.s32.totalorder %s18, 0
      %p71 = por %p69, %p70
      %s72 = ssub.s32 %s12, %s19
      %p73 = scmp.eq.s32.totalorder %s72, 0
      %s75 = sadd.s32 %s74, 1
      %s76 = scalar_select %p73, %s74, %s75
      %p79 = pneg %p73
      %p80 = scmp.eq.s32.totalorder %s12, 1
      %p81 = por %p79, %p80
      %p82 = scmp.ne.s32.totalorder %s74, %s77
      %p83 = scmp.eq.s32.totalorder %s12, 0
      %p84 = por %p82, %p83
      %p85 = scmp.ne.s32.totalorder %s74, %s77
      %p86 = scmp.eq.s32.totalorder %s17, 1
      %p87 = por %p85, %p86
      %p88 = scmp.ne.s32.totalorder %s77, %s78
      %p89 = scmp.eq.s32.totalorder %s17, 0
      %p90 = por %p88, %p89
      %p91 = scmp.ne.s32.totalorder %s77, %s78
      %p92 = scmp.eq.s32.totalorder %s18, 1
      %p93 = por %p91, %p92
      %p95 = scmp.ne.s32.totalorder %s78, %s94
      %p96 = scmp.eq.s32.totalorder %s18, 0
      %p97 = por %p95, %p96
      %p98 = scmp.le.s32.totalorder 1, %s12
      %p99 = scmp.lt.s32.totalorder %s12, 3
      %p100 = pnand %p98, %p99
      %p101 = pneg %p100
      // Predicated region
      $region9: #{tpu_custom_call.1} parent=5 // pred_check
        _
      $region10: #{tpu_custom_call.1} parent=5 // pred_check_branch
        %103 = sbr.rel (%p100) target = $region12
      $region11: #{tpu_custom_call.1} parent=5 // pred_region
        %s104 = ssub.s32 %s12, 1
      $region12: #{tpu_custom_call.1} parent=5 // pred_fallthru
        _
      %p105 = scmp.lt.s32.totalorder %s12, 2
      // Predicated region
      $region13: #{tpu_custom_call.1} parent=5 // pred_check
        %p106 = pneg %p105
      $region14: #{tpu_custom_call.1} parent=5 // pred_check_branch
        %108 = sbr.rel (%p106) target = $region16
      $region15: #{tpu_custom_call.1} parent=5 // pred_region
        // Predicated region
        $region17: #{tpu_custom_call.1} parent=15 // pred_check
          %p109 = pneg %p32
        $region18: #{tpu_custom_call.1} parent=15 // pred_check_branch
          %111 = sbr.rel (%p109) target = $region20
        $region19: #{tpu_custom_call.1} parent=15 // pred_region
          %s112 = sand.u32 %s22, 1
          %s113 = scalar_lea.sflag [#allocation3], %s112
          %s114 = sand.u32 %s22, 1
          %s115 = smul.addr %s114, 128
          %s116 = scalar_lea.vmem [#allocation2], %s115
          %118 = vsyncadd %s113, 0
          %s119 = smul.addr %s12, 16
          %s120 = smul.addr %s119, 8
          %s121 = scalar_lea.hbm %s0, %s120
          %s122 = sshll.u32 %s121, 4
          %s123 = int_to_ptr.hbm [resolvable:$true] %s122
          %s124 = sshll.u32 %s116, 4
          %s125 = int_to_ptr.vmem [resolvable:$true] %s124
          %130 = dma.hbm_to_vmem [thread:$0]  %s123, 2048, %s125, %s113, 512, 512, 32
        $region20: #{tpu_custom_call.1} parent=15 // pred_fallthru
          _
      $region16: #{tpu_custom_call.1} parent=5 // pred_fallthru
        _
      %p131 = scmp.le.s32.totalorder 1, %s12
      %p132 = scmp.lt.s32.totalorder %s12, 3
      %p133 = pnand %p131, %p132
      %p134 = pneg %p133
      // Predicated region
      $region21: #{tpu_custom_call.1} parent=5 // pred_check
        _
      $region22: #{tpu_custom_call.1} parent=5 // pred_check_branch
        %136 = sbr.rel (%p133) target = $region24
      $region23: #{tpu_custom_call.1} parent=5 // pred_region
        %s137 = ssub.s32 %s12, 1
        %s138 = sand.u32 %s25, 1
        %s139 = scalar_lea.sflag [#allocation3], %s138
        %s140 = sand.u32 %s25, 1
        %s141 = smul.addr %s140, 128
        %s142 = scalar_lea.vmem [#allocation2], %s141
        // Predicated region
        $region25: #{tpu_custom_call.1} parent=23 // pred_check
          %p143 = pneg %p38
        $region26: #{tpu_custom_call.1} parent=23 // pred_check_branch
          %145 = sbr.rel (%p143) target = $region28
        $region27: #{tpu_custom_call.1} parent=23 // pred_region
          %147 = dma.done %s139, 2048
        $region28: #{tpu_custom_call.1} parent=23 // pred_fallthru
          _
        %s148 = sand.u32 %s25, 1
        %s149 = scalar_lea.sflag [#allocation3], %s148
        %s150 = sand.u32 %s25, 1
        %s151 = smul.addr %s150, 128
        %s152 = scalar_lea.vmem [#allocation2], %s151
        %p153 = pneg %p38
        %p154 = pneg %p35
        %p155 = pneg %p64
        %p156 = pneg %p61
        %p157 = scmp.lt.s32.totalorder %s17, 1
        %s158 = scalar_select %p157, %s17, 1
        %s159 = smul.addr %s158, 4
        %s160 = smul.addr %s159, 8
        %s161 = scalar_lea.vmem %s1, %s160
        %p162 = pneg %p90
        %p163 = pneg %p87
        %p164 = scmp.lt.s32.totalorder %s17, 1
        %s165 = scalar_select %p164, %s17, 1
        %s166 = smul.addr %s165, 4
        %s167 = smul.addr %s166, 8
        %s168 = scalar_lea.vmem %s2, %s167
        %p169 = scmp.lt.s32.totalorder %s17, 1
        %s170 = scalar_select %p169, %s17, 1
        %s171 = smul.addr %s170, 4
        %s172 = smul.addr %s171, 8
        %s173 = scalar_lea.vmem %s1, %s172
        %p174 = scmp.lt.s32.totalorder %s17, 1
        %s175 = scalar_select %p174, %s17, 1
        %s176 = smul.addr %s175, 4
        %s177 = smul.addr %s176, 8
        %s178 = scalar_lea.vmem %s2, %s177
        %v179 = vld [vmem:[%s142] sm:$0xff]
        %v180 = vld [vmem:[%s142 + $0x8] sm:$0xff]
        %v181 = vld [vmem:[%s142 + $0x10] sm:$0xff]
        %v182 = vld [vmem:[%s142 + $0x18] sm:$0xff]
        %v183 = vld [vmem:[%s142 + $0x20] sm:$0xff]
        %v184 = vld [vmem:[%s142 + $0x28] sm:$0xff]
        %v185 = vld [vmem:[%s142 + $0x30] sm:$0xff]
        %v186 = vld [vmem:[%s142 + $0x38] sm:$0xff]
        %v187 = vld [vmem:[%s142 + $0x40] sm:$0xff]
        %v188 = vld [vmem:[%s142 + $0x48] sm:$0xff]
        %v189 = vld [vmem:[%s142 + $0x50] sm:$0xff]
        %v190 = vld [vmem:[%s142 + $0x58] sm:$0xff]
        %v191 = vld [vmem:[%s142 + $0x60] sm:$0xff]
        %v192 = vld [vmem:[%s142 + $0x68] sm:$0xff]
        %v193 = vld [vmem:[%s142 + $0x70] sm:$0xff]
        %v194 = vld [vmem:[%s142 + $0x78] sm:$0xff]
        %v195 = vadd.f32 %v179, %v180
        %v196 = vadd.f32 %v195, %v181
        %v197 = vadd.f32 %v196, %v182
        %198 = vadd.xlane.f32.xlu0 %v197
        %v199 = vpop.xlane.xlu0 %198
        %v200 = vadd.f32 %v183, %v184
        %v201 = vadd.f32 %v200, %v185
        %v202 = vadd.f32 %v201, %v186
        %203 = vadd.xlane.f32.xlu0 %v202
        %v204 = vpop.xlane.xlu0 %203
        %v205 = vadd.f32 %v187, %v188
        %v206 = vadd.f32 %v205, %v189
        %v207 = vadd.f32 %v206, %v190
        %208 = vadd.xlane.f32.xlu0 %v207
        %v209 = vpop.xlane.xlu0 %208
        %v210 = vadd.f32 %v191, %v192
        %v211 = vadd.f32 %v210, %v193
        %v212 = vadd.f32 %v211, %v194
        %213 = vadd.xlane.f32.xlu0 %v212
        %v214 = vpop.xlane.xlu0 %213
        %v215 = vmul.f32 %v199, 0.001953125
        %v216 = vmul.f32 %v204, 0.001953125
        %v217 = vmul.f32 %v209, 0.001953125
        %v218 = vmul.f32 %v214, 0.001953125
        %v219 = vsub.f32 %v179, %v215
        %v220 = vsub.f32 %v180, %v215
        %v221 = vsub.f32 %v181, %v215
        %v222 = vsub.f32 %v182, %v215
        %v223 = vsub.f32 %v183, %v216
        %v224 = vsub.f32 %v184, %v216
        %v225 = vsub.f32 %v185, %v216
        %v226 = vsub.f32 %v186, %v216
        %v227 = vsub.f32 %v187, %v217
        %v228 = vsub.f32 %v188, %v217
        %v229 = vsub.f32 %v189, %v217
        %v230 = vsub.f32 %v190, %v217
        %v231 = vsub.f32 %v191, %v218
        %v232 = vsub.f32 %v192, %v218
        %v233 = vsub.f32 %v193, %v218
        %v234 = vsub.f32 %v194, %v218
        %v235 = vmul.f32 %v219, %v219
        %v236 = vmul.f32 %v220, %v220
        %v237 = vmul.f32 %v221, %v221
        %v238 = vmul.f32 %v222, %v222
        %v239 = vmul.f32 %v223, %v223
        %v240 = vmul.f32 %v224, %v224
        %v241 = vmul.f32 %v225, %v225
        %v242 = vmul.f32 %v226, %v226
        %v243 = vmul.f32 %v227, %v227
        %v244 = vmul.f32 %v228, %v228
        %v245 = vmul.f32 %v229, %v229
        %v246 = vmul.f32 %v230, %v230
        %v247 = vmul.f32 %v231, %v231
        %v248 = vmul.f32 %v232, %v232
        %v249 = vmul.f32 %v233, %v233
        %v250 = vmul.f32 %v234, %v234
        %v251 = vadd.f32 %v235, %v236
        %v252 = vadd.f32 %v251, %v237
        %v253 = vadd.f32 %v252, %v238
        %254 = vadd.xlane.f32.xlu0 %v253
        %v255 = vpop.xlane.xlu0 %254
        %v256 = vadd.f32 %v239, %v240
        %v257 = vadd.f32 %v256, %v241
        %v258 = vadd.f32 %v257, %v242
        %259 = vadd.xlane.f32.xlu0 %v258
        %v260 = vpop.xlane.xlu0 %259
        %v261 = vadd.f32 %v243, %v244
        %v262 = vadd.f32 %v261, %v245
        %v263 = vadd.f32 %v262, %v246
        %264 = vadd.xlane.f32.xlu0 %v263
        %v265 = vpop.xlane.xlu0 %264
        %v266 = vadd.f32 %v247, %v248
        %v267 = vadd.f32 %v266, %v249
        %v268 = vadd.f32 %v267, %v250
        %269 = vadd.xlane.f32.xlu0 %v268
        %v270 = vpop.xlane.xlu0 %269
        %v271 = vmul.f32 %v255, 0.001953125
        %v272 = vmul.f32 %v260, 0.001953125
        %v273 = vmul.f32 %v265, 0.001953125
        %v274 = vmul.f32 %v270, 0.001953125
        %vm275 = vcmask 7168
        %276 = vst.msk [vmem:[%s173] sm:$0xff] %vm275, %v215
        %277 = vst.msk [vmem:[%s173 + $0x8] sm:$0xff] %vm275, %v216
        %278 = vst.msk [vmem:[%s173 + $0x10] sm:$0xff] %vm275, %v217
        %279 = vst.msk [vmem:[%s173 + $0x18] sm:$0xff] %vm275, %v218
        %v280 = vadd.f32 %v271, 1e-06
        %v281 = vadd.f32 %v272, 1e-06
        %v282 = vadd.f32 %v273, 1e-06
        %v283 = vadd.f32 %v274, 1e-06
        %v284 = vrsqrt.pop %v280
        %v285 = vmul.f32 %v284, %v280
        %v286 = vmul.f32 %v285, %v284
        %v287 = vmul.f32 0.5, %v286
        %v288 = vsub.f32 1.5, %v287
        %v289 = vmul.f32 %v284, %v288
        %vm290 = vweird.f32 %v280
        %vm291 = vweird.f32 %v284
        %vm292 = vmor %vm290, %vm291
        %v293 = vsel %vm292, %v284, %v289
        %v294 = vrsqrt.pop %v281
        %v295 = vmul.f32 %v294, %v281
        %v296 = vmul.f32 %v295, %v294
        %v297 = vmul.f32 0.5, %v296
        %v298 = vsub.f32 1.5, %v297
        %v299 = vmul.f32 %v294, %v298
        %vm300 = vweird.f32 %v281
        %vm301 = vweird.f32 %v294
        %vm302 = vmor %vm300, %vm301
        %v303 = vsel %vm302, %v294, %v299
        %v304 = vrsqrt.pop %v282
        %v305 = vmul.f32 %v304, %v282
        %v306 = vmul.f32 %v305, %v304
        %v307 = vmul.f32 0.5, %v306
        %v308 = vsub.f32 1.5, %v307
        %v309 = vmul.f32 %v304, %v308
        %vm310 = vweird.f32 %v282
        %vm311 = vweird.f32 %v304
        %vm312 = vmor %vm310, %vm311
        %v313 = vsel %vm312, %v304, %v309
        %v314 = vrsqrt.pop %v283
        %v315 = vmul.f32 %v314, %v283
        %v316 = vmul.f32 %v315, %v314
        %v317 = vmul.f32 0.5, %v316
        %v318 = vsub.f32 1.5, %v317
        %v319 = vmul.f32 %v314, %v318
        %vm320 = vweird.f32 %v283
        %vm321 = vweird.f32 %v314
        %vm322 = vmor %vm320, %vm321
        %v323 = vsel %vm322, %v314, %v319
        %324 = vst.msk [vmem:[%s178] sm:$0xff] %vm275, %v293
        %325 = vst.msk [vmem:[%s178 + $0x8] sm:$0xff] %vm275, %v303
        %326 = vst.msk [vmem:[%s178 + $0x10] sm:$0xff] %vm275, %v313
        %327 = vst.msk [vmem:[%s178 + $0x18] sm:$0xff] %vm275, %v323
        %p328 = scmp.lt.s32.totalorder %s17, 1
        %s329 = scalar_select %p328, %s17, 1
        %s330 = smul.addr %s329, 4
        %s331 = smul.addr %s330, 8
        %s332 = scalar_lea.vmem %s1, %s331
        %p333 = scmp.lt.s32.totalorder %s17, 1
        %s334 = scalar_select %p333, %s17, 1
        %s335 = smul.addr %s334, 4
        %s336 = smul.addr %s335, 8
        %s337 = scalar_lea.vmem %s2, %s336
        // Predicated region
        $region29: #{tpu_custom_call.1} parent=23 // pred_check
          %p338 = pneg %p61
        $region30: #{tpu_custom_call.1} parent=23 // pred_check_branch
          %340 = sbr.rel (%p338) target = $region32
        $region31: #{tpu_custom_call.1} parent=23 // pred_region
          _
        $region32: #{tpu_custom_call.1} parent=23 // pred_fallthru
          _
        // Predicated region
        $region33: #{tpu_custom_call.1} parent=23 // pred_check
          %p341 = pneg %p87
        $region34: #{tpu_custom_call.1} parent=23 // pred_check_branch
          %343 = sbr.rel (%p341) target = $region36
        $region35: #{tpu_custom_call.1} parent=23 // pred_region
          _
        $region36: #{tpu_custom_call.1} parent=23 // pred_fallthru
          _
      $region24: #{tpu_custom_call.1} parent=5 // pred_fallthru
        _
      %p344 = scmp.le.s32.totalorder 2, %s12
      // Predicated region
      $region37: #{tpu_custom_call.1} parent=5 // pred_check
        %p345 = pneg %p344
      $region38: #{tpu_custom_call.1} parent=5 // pred_check_branch
        %347 = sbr.rel (%p345) target = $region40
      $region39: #{tpu_custom_call.1} parent=5 // pred_region
        %s348 = ssub.s32 %s12, 2
        // Predicated region
        $region41: #{tpu_custom_call.1} parent=39 // pred_check
          %p349 = pneg %p67
        $region42: #{tpu_custom_call.1} parent=39 // pred_check_branch
          %351 = sbr.rel (%p349) target = $region44
        $region43: #{tpu_custom_call.1} parent=39 // pred_region
          %p352 = scmp.lt.s32.totalorder %s18, 1
          %s353 = scalar_select %p352, %s18, 1
          %s354 = smul.addr %s353, 4
          %s355 = smul.addr %s354, 8
          %s356 = scalar_lea.vmem %s1, %s355
        $region44: #{tpu_custom_call.1} parent=39 // pred_fallthru
          _
        // Predicated region
        $region45: #{tpu_custom_call.1} parent=39 // pred_check
          %p357 = pneg %p93
        $region46: #{tpu_custom_call.1} parent=39 // pred_check_branch
          %359 = sbr.rel (%p357) target = $region48
        $region47: #{tpu_custom_call.1} parent=39 // pred_region
          %p360 = scmp.lt.s32.totalorder %s18, 1
          %s361 = scalar_select %p360, %s18, 1
          %s362 = smul.addr %s361, 4
          %s363 = smul.addr %s362, 8
          %s364 = scalar_lea.vmem %s2, %s363
        $region48: #{tpu_custom_call.1} parent=39 // pred_fallthru
          _
      $region40: #{tpu_custom_call.1} parent=5 // pred_fallthru
        _
    $region6: #{tpu_custom_call.1} parent=1 // loop_footer
      %s16 = sadd.s32 1, %s12
    $region7: #{tpu_custom_call.1} parent=1 // loop_footer_branch
      %11 = sbr.rel target = $region3
    $region8: #{tpu_custom_call.1} parent=1 // loop_exit
      _
    %365 = vsyncpa [#allocation3], 1
    %s366 = scalar_lea.sflag [#allocation3], 1
    %367 = vsyncpa %s366, 1

</llo_original>
